<compile_context>
chip_gen: v7x
topology: tpu7x:2x2x1
jax: 0.10.0
libtpu: 0.0.40
codegen_flags: <defaults>
</compile_context>

<pallas_src>
import jax
import jax.numpy as jnp
from jax.experimental import pallas as pl
from jax.experimental.pallas import tpu as pltpu

ALPHA = 1.2
BETA = 1.5
EPS = 1e-4


def _ltv_kernel(orig_ref, illum_ref, out_ref, carry_L_ref, carry_ill_ref):
    # orig_ref: (3, TH, W), illum_ref: (TH, W), out_ref: (1, W) accumulator,
    # carry_*_ref: (1, W) last row of the previous H tile (same image).
    h = pl.program_id(1)
    n_h = pl.num_programs(1)
    TH, W = illum_ref.shape

    r = orig_ref[0].astype(jnp.float32)
    g = orig_ref[1].astype(jnp.float32)
    b = orig_ref[2].astype(jnp.float32)
    lum = r * 0.299 + g * 0.587 + b * 0.114
    L = jnp.log(lum + EPS)                      # log-luminance
    ill = illum_ref[...].astype(jnp.float32)

    def edge_weight(d):
        # 1 / (|d|^alpha + eps); BETA is folded into the wrapper-side scale.
        # |d|^alpha as exp(alpha*log|d|): log(0) -> -inf -> exp -> 0 (matches pow).
        mag = jnp.exp(ALPHA * jnp.log(jnp.abs(d)))
        return pl.reciprocal(mag + EPS, approx=True)

    # Horizontal (lane-axis) neighbours and vertical (sublane-axis) neighbours
    # via XLU rolls: rolled[..., j] = x[..., (j+1) mod N] (lane-dense, no
    # misaligned slices).  Wrap-around positions are masked out below.
    dx = L - pltpu.roll(L, shift=W - 1, axis=1)
    ix = ill - pltpu.roll(ill, shift=W - 1, axis=1)
    dy = L - pltpu.roll(L, shift=TH - 1, axis=0)
    iy = ill - pltpu.roll(ill, shift=TH - 1, axis=0)

    loss_x = edge_weight(dx) * ix * ix          # valid rows: all but the global last row
    loss_y = edge_weight(dy) * iy * iy          # valid rows: all but the tile's last row

    # Row masks: (TH, 1) broadcasts.  The tile's last row is invalid for the
    # vertical term always (neighbour lives in the next tile -> seam below);
    # for the horizontal term only when this is the last tile of the image.
    row = jax.lax.broadcasted_iota(jnp.int32, (TH, 1), 0)
    row_mask_y = (row < TH - 1).astype(jnp.float32)
    limit_x = TH - jnp.where(h == n_h - 1, 1, 0)
    row_mask_x = (row < limit_x).astype(jnp.float32)

    tile_sum = jnp.sum(loss_x * row_mask_x + loss_y * row_mask_y,
                       axis=0, keepdims=True)   # (1, W)

    # Column W-1 is never valid; applied once, after the row reduction.
    col_mask = (jax.lax.broadcasted_iota(jnp.int32, (1, W), 1)
                < W - 1).astype(jnp.float32)

    @pl.when(h == 0)
    def _():
        out_ref[...] = tile_sum * col_mask

    @pl.when(h > 0)
    def _():
        # Seam: vertical term for the last row of the previous tile against the
        # first row of this tile (that row is always < H-1, so no row mask).
        d_b = carry_L_ref[...] - L[0:1, :]
        i_b = carry_ill_ref[...] - ill[0:1, :]
        seam = edge_weight(d_b) * i_b * i_b
        out_ref[...] += (tile_sum + seam) * col_mask

    # Stash this tile's last row for the seam at the next H step.
    carry_L_ref[...] = L[TH - 1:TH, :]
    carry_ill_ref[...] = ill[TH - 1:TH, :]


def _pick_tile_h(H, max_th=256):
    """Largest aligned tile height: full image if small, else a multiple-of-8
    divisor of H (keeps every DMA / sublane access aligned, no halo needed)."""
    if H <= max_th:
        return H
    for th in range(max_th - (max_th % 8), 7, -8):
        if H % th == 0:
            return th
    # TODO(synk): pad H (or use Element-offset halo tiles) when H has no
    # multiple-of-8 divisor <= max_th; fall back to whole-image blocks for now.
    return H


def ltv_loss(origin, illumination, weight, *, tile_h=None):
    """origin: [B,3,H,W], illumination: [B,1,H,W] (f32 or bf16), weight: scalar."""
    B, C, H, W = origin.shape
    assert C == 3
    assert illumination.shape == (B, 1, H, W)

    TH = _pick_tile_h(H) if tile_h is None else tile_h
    assert H % TH == 0 and (TH == H or TH % 8 == 0), (H, TH)
    n_h = H // TH

    # Tiled VMEM footprint: ~2x double-buffered inputs + ~12 live f32 temporaries.
    in_bytes_per_step = 4 * TH * W * origin.dtype.itemsize
    vmem_limit = int(min(64 << 20,
                         max(16 << 20, 2 * in_bytes_per_step + 48 * TH * W + (2 << 20))))

    cost = pl.CostEstimate(
        flops=int(35 * B * H * W),
        transcendentals=int(7 * B * H * W),
        bytes_accessed=int(origin.size * origin.dtype.itemsize
                           + illumination.size * illumination.dtype.itemsize
                           + 4 * B * W),
    )

    partial = pl.pallas_call(
        _ltv_kernel,
        out_shape=jax.ShapeDtypeStruct((B, 1, W), jnp.float32),
        grid_spec=pltpu.PrefetchScalarGridSpec(
            num_scalar_prefetch=0,
            grid=(B, n_h),
            in_specs=[
                pl.BlockSpec((None, 3, TH, W), lambda b, h: (b, 0, h, 0)),
                pl.BlockSpec((None, None, TH, W), lambda b, h: (b, 0, h, 0)),
            ],
            out_specs=pl.BlockSpec((None, 1, W), lambda b, h: (b, 0, 0)),
            scratch_shapes=[
                pltpu.VMEM((1, W), jnp.float32),   # carried log-luminance row
                pltpu.VMEM((1, W), jnp.float32),   # carried illumination row
            ],
        ),
        compiler_params=pltpu.CompilerParams(
            dimension_semantics=("parallel", "arbitrary"),
            vmem_limit_bytes=vmem_limit,
        ),
        cost_estimate=cost,
    )(origin, illumination)

    # BETA fold + mean over B*(H-1)*(W-1) + /2 + weight, all in one scalar scale.
    denom = jnp.float32(B * (H - 1) * (W - 1))
    total = jnp.sum(partial)
    return total * (BETA * 0.5 / denom) * jnp.asarray(weight, jnp.float32)


def _ltv_loss_ref(origin, illumination, weight):
    """Pure-JAX reference mirroring the PyTorch forward."""
    I = (origin[:, 0:1] * 0.299 + origin[:, 1:2] * 0.587 + origin[:, 2:3] * 0.114)
    L = jnp.log(I + EPS)
    dx = L[:, :, :-1, :-1] - L[:, :, :-1, 1:]
    dy = L[:, :, :-1, :-1] - L[:, :, 1:, :-1]
    dx = BETA / (jnp.power(jnp.abs(dx), ALPHA) + EPS)
    dy = BETA / (jnp.power(jnp.abs(dy), ALPHA) + EPS)
    x_loss = dx * (illumination[:, :, :-1, :-1] - illumination[:, :, :-1, 1:]) ** 2
    y_loss = dy * (illumination[:, :, :-1, :-1] - illumination[:, :, 1:, :-1]) ** 2
    return jnp.mean(x_loss + y_loss) / 2.0 * weight


if __name__ == "__main__":
    key = jax.random.PRNGKey(0)
    k1, k2 = jax.random.split(key)
    B, H, W = 2, 16, 16
    origin = jax.random.uniform(k1, (B, 3, H, W), jnp.float32, 0.01, 1.0)
    illumination = jax.random.uniform(k2, (B, 1, H, W), jnp.float32, 0.01, 1.0)
    weight = 2.0

    ref = _ltv_loss_ref(origin, illumination, weight)

    # Single-tile path (TH == H).
    out_full = ltv_loss(origin, illumination, weight)
    jax.block_until_ready(out_full)
    # H-tiled path (TH == 8, exercises the carried-row seam + accumulator).
    out_tiled = ltv_loss(origin, illumination, weight, tile_h=8)
    jax.block_until_ready(out_tiled)

    # rtol accommodates the approx EUP reciprocal (Newton step dropped per review).
    assert jnp.allclose(out_full, ref, rtol=5e-3, atol=1e-6), (out_full, ref)
    assert jnp.allclose(out_tiled, ref, rtol=5e-3, atol=1e-6), (out_tiled, ref)
    print("KERNEL_OK")
</pallas_src>

<mosaic_0001>
module attributes {stable_mosaic.version = 11 : i64} {
  func.func @_ltv_kernel(%arg0: i32, %arg1: i32, %arg2: memref<1x3x16x16xf32, #tpu.memory_space<vmem>>, %arg3: memref<1x1x16x16xf32, #tpu.memory_space<vmem>>, %arg4: memref<1x1x16xf32, #tpu.memory_space<vmem>>, %arg5: memref<1x16xf32, #tpu.memory_space<vmem>>, %arg6: memref<1x16xf32, #tpu.memory_space<vmem>>) attributes {dimension_semantics = [#tpu.dimension_semantics<parallel>, #tpu.dimension_semantics<arbitrary>], iteration_bounds = array<i64: 2, 1>, scalar_prefetch = 0 : i64, scratch_operands = 2 : i64, tpu.core_type = #tpu.core_type<tc>, window_params = [{transform_indices = @transform_0, window_bounds = array<i64: 1, 3, 16, 16>}, {transform_indices = @transform_1, window_bounds = array<i64: 1, 1, 16, 16>}, {transform_indices = @transform_2, window_bounds = array<i64: 1, 1, 16>}]} {
    %c0 = arith.constant 0 : index
    %c0_0 = arith.constant 0 : index
    %c0_1 = arith.constant 0 : index
    %c0_2 = arith.constant 0 : index
    %0 = vector.load %arg2[%c0, %c0_0, %c0_1, %c0_2] : memref<1x3x16x16xf32, #tpu.memory_space<vmem>>, vector<1x1x16x16xf32>
    %1 = vector.shape_cast %0 : vector<1x1x16x16xf32> to vector<16x16xf32>
    %c0_3 = arith.constant 0 : index
    %c1 = arith.constant 1 : index
    %c0_4 = arith.constant 0 : index
    %c0_5 = arith.constant 0 : index
    %2 = vector.load %arg2[%c0_3, %c1, %c0_4, %c0_5] : memref<1x3x16x16xf32, #tpu.memory_space<vmem>>, vector<1x1x16x16xf32>
    %3 = vector.shape_cast %2 : vector<1x1x16x16xf32> to vector<16x16xf32>
    %c0_6 = arith.constant 0 : index
    %c2 = arith.constant 2 : index
    %c0_7 = arith.constant 0 : index
    %c0_8 = arith.constant 0 : index
    %4 = vector.load %arg2[%c0_6, %c2, %c0_7, %c0_8] : memref<1x3x16x16xf32, #tpu.memory_space<vmem>>, vector<1x1x16x16xf32>
    %5 = vector.shape_cast %4 : vector<1x1x16x16xf32> to vector<16x16xf32>
    %cst = arith.constant 2.990000e-01 : f32
    %6 = vector.broadcast %cst : f32 to vector<16x16xf32>
    %7 = arith.mulf %1, %6 : vector<16x16xf32>
    %cst_9 = arith.constant 5.870000e-01 : f32
    %8 = vector.broadcast %cst_9 : f32 to vector<16x16xf32>
    %9 = arith.mulf %3, %8 : vector<16x16xf32>
    %10 = arith.addf %7, %9 : vector<16x16xf32>
    %cst_10 = arith.constant 1.140000e-01 : f32
    %11 = vector.broadcast %cst_10 : f32 to vector<16x16xf32>
    %12 = arith.mulf %5, %11 : vector<16x16xf32>
    %13 = arith.addf %10, %12 : vector<16x16xf32>
    %cst_11 = arith.constant 9.99999974E-5 : f32
    %14 = vector.broadcast %cst_11 : f32 to vector<16x16xf32>
    %15 = arith.addf %13, %14 : vector<16x16xf32>
    %16 = math.log %15 : vector<16x16xf32>
    %c0_12 = arith.constant 0 : index
    %c0_13 = arith.constant 0 : index
    %c0_14 = arith.constant 0 : index
    %c0_15 = arith.constant 0 : index
    %17 = vector.load %arg3[%c0_12, %c0_13, %c0_14, %c0_15] : memref<1x1x16x16xf32, #tpu.memory_space<vmem>>, vector<1x1x16x16xf32>
    %18 = vector.shape_cast %17 : vector<1x1x16x16xf32> to vector<16x16xf32>
    %c15_i32 = arith.constant 15 : i32
    %19 = tpu.dynamic_rotate %16 by %c15_i32 dim 1 : vector<16x16xf32>, i32 -> vector<16x16xf32>
    %20 = arith.subf %16, %19 : vector<16x16xf32>
    %c15_i32_16 = arith.constant 15 : i32
    %21 = tpu.dynamic_rotate %18 by %c15_i32_16 dim 1 : vector<16x16xf32>, i32 -> vector<16x16xf32>
    %22 = arith.subf %18, %21 : vector<16x16xf32>
    %c15_i32_17 = arith.constant 15 : i32
    %23 = tpu.dynamic_rotate %16 by %c15_i32_17 dim 0 : vector<16x16xf32>, i32 -> vector<16x16xf32>
    %24 = arith.subf %16, %23 : vector<16x16xf32>
    %c15_i32_18 = arith.constant 15 : i32
    %25 = tpu.dynamic_rotate %18 by %c15_i32_18 dim 0 : vector<16x16xf32>, i32 -> vector<16x16xf32>
    %26 = arith.subf %18, %25 : vector<16x16xf32>
    %27 = math.absf %20 : vector<16x16xf32>
    %28 = math.log %27 : vector<16x16xf32>
    %cst_19 = arith.constant 1.200000e+00 : f32
    %29 = vector.broadcast %cst_19 : f32 to vector<16x16xf32>
    %30 = arith.mulf %29, %28 : vector<16x16xf32>
    %31 = math.exp %30 : vector<16x16xf32>
    %cst_20 = arith.constant 9.99999974E-5 : f32
    %32 = vector.broadcast %cst_20 : f32 to vector<16x16xf32>
    %33 = arith.addf %31, %32 : vector<16x16xf32>
    %34 = tpu.reciprocal %33 {approx = true} : vector<16x16xf32> -> vector<16x16xf32>
    %35 = arith.mulf %34, %22 : vector<16x16xf32>
    %36 = arith.mulf %35, %22 : vector<16x16xf32>
    %37 = math.absf %24 : vector<16x16xf32>
    %38 = math.log %37 : vector<16x16xf32>
    %cst_21 = arith.constant 1.200000e+00 : f32
    %39 = vector.broadcast %cst_21 : f32 to vector<16x16xf32>
    %40 = arith.mulf %39, %38 : vector<16x16xf32>
    %41 = math.exp %40 : vector<16x16xf32>
    %cst_22 = arith.constant 9.99999974E-5 : f32
    %42 = vector.broadcast %cst_22 : f32 to vector<16x16xf32>
    %43 = arith.addf %41, %42 : vector<16x16xf32>
    %44 = tpu.reciprocal %43 {approx = true} : vector<16x16xf32> -> vector<16x16xf32>
    %45 = arith.mulf %44, %26 : vector<16x16xf32>
    %46 = arith.mulf %45, %26 : vector<16x16xf32>
    %47 = tpu.iota {dimensions = array<i32: 0>} : vector<16x1xi32>
    %c15_i32_23 = arith.constant 15 : i32
    %48 = vector.broadcast %c15_i32_23 : i32 to vector<16x1xi32>
    %49 = arith.cmpi slt, %47, %48 : vector<16x1xi32>
    %50 = arith.extui %49 : vector<16x1xi1> to vector<16x1xi32>
    %51 = arith.sitofp %50 : vector<16x1xi32> to vector<16x1xf32>
    %c0_i32 = arith.constant 0 : i32
    %52 = arith.cmpi eq, %arg1, %c0_i32 : i32
    %c1_i32 = arith.constant 1 : i32
    %c0_i32_24 = arith.constant 0 : i32
    %53 = arith.select %52, %c1_i32, %c0_i32_24 : i32
    %c16_i32 = arith.constant 16 : i32
    %54 = arith.subi %c16_i32, %53 : i32
    %55 = vector.broadcast %54 : i32 to vector<16x1xi32>
    %56 = arith.cmpi slt, %47, %55 : vector<16x1xi32>
    %57 = arith.extui %56 : vector<16x1xi1> to vector<16x1xi32>
    %58 = arith.sitofp %57 : vector<16x1xi32> to vector<16x1xf32>
    %59 = vector.broadcast %58 : vector<16x1xf32> to vector<16x16xf32>
    %60 = arith.mulf %36, %59 : vector<16x16xf32>
    %61 = vector.broadcast %51 : vector<16x1xf32> to vector<16x16xf32>
    %62 = arith.mulf %46, %61 : vector<16x16xf32>
    %63 = arith.addf %60, %62 : vector<16x16xf32>
    %cst_25 = arith.constant dense<0.000000e+00> : vector<16xf32>
    %64 = vector.multi_reduction <add>, %63, %cst_25 [0] : vector<16x16xf32> to vector<16xf32>
    %65 = vector.shape_cast %64 : vector<16xf32> to vector<1x16xf32>
    %66 = tpu.iota {dimensions = array<i32: 1>} : vector<1x16xi32>
    %c15_i32_26 = arith.constant 15 : i32
    %67 = vector.broadcast %c15_i32_26 : i32 to vector<1x16xi32>
    %68 = arith.cmpi slt, %66, %67 : vector<1x16xi32>
    %69 = arith.extui %68 : vector<1x16xi1> to vector<1x16xi32>
    %70 = arith.sitofp %69 : vector<1x16xi32> to vector<1x16xf32>
    %c0_i32_27 = arith.constant 0 : i32
    %71 = arith.cmpi eq, %arg1, %c0_i32_27 : i32
    %72 = arith.extui %71 : i1 to i32
    %c0_i32_28 = arith.constant 0 : i32
    %73 = arith.cmpi ne, %72, %c0_i32_28 : i32
    scf.if %73 {
      %81 = arith.mulf %65, %70 : vector<1x16xf32>
      %c0_35 = arith.constant 0 : index
      %c0_36 = arith.constant 0 : index
      %c0_37 = arith.constant 0 : index
      %82 = vector.load %arg4[%c0_35, %c0_36, %c0_37] : memref<1x1x16xf32, #tpu.memory_space<vmem>>, vector<1x1x16xf32>
      %83 = vector.shape_cast %82 : vector<1x1x16xf32> to vector<1x16xf32>
      %84 = vector.shape_cast %81 : vector<1x16xf32> to vector<1x1x16xf32>
      tpu.vector_store %arg4[%c0_35, %c0_36, %c0_37], %84 {strides = array<i32>} : memref<1x1x16xf32, #tpu.memory_space<vmem>>, vector<1x1x16xf32>,
    } else {
    }
    %c0_i32_29 = arith.constant 0 : i32
    %74 = arith.cmpi sgt, %arg1, %c0_i32_29 : i32
    %75 = arith.extui %74 : i1 to i32
    %c0_i32_30 = arith.constant 0 : i32
    %76 = arith.cmpi ne, %75, %c0_i32_30 : i32
    scf.if %76 {
      %c0_35 = arith.constant 0 : index
      %c0_36 = arith.constant 0 : index
      %81 = vector.load %arg5[%c0_35, %c0_36] : memref<1x16xf32, #tpu.memory_space<vmem>>, vector<1x16xf32>
      %82 = vector.extract_strided_slice %16 {offsets = [0, 0], sizes = [1, 16], strides = [1, 1]} : vector<16x16xf32> to vector<1x16xf32>
      %83 = arith.subf %81, %82 : vector<1x16xf32>
      %c0_37 = arith.constant 0 : index
      %c0_38 = arith.constant 0 : index
      %84 = vector.load %arg6[%c0_37, %c0_38] : memref<1x16xf32, #tpu.memory_space<vmem>>, vector<1x16xf32>
      %85 = vector.extract_strided_slice %18 {offsets = [0, 0], sizes = [1, 16], strides = [1, 1]} : vector<16x16xf32> to vector<1x16xf32>
      %86 = arith.subf %84, %85 : vector<1x16xf32>
      %87 = math.absf %83 : vector<1x16xf32>
      %88 = math.log %87 : vector<1x16xf32>
      %cst_39 = arith.constant 1.200000e+00 : f32
      %89 = vector.broadcast %cst_39 : f32 to vector<1x16xf32>
      %90 = arith.mulf %89, %88 : vector<1x16xf32>
      %91 = math.exp %90 : vector<1x16xf32>
      %cst_40 = arith.constant 9.99999974E-5 : f32
      %92 = vector.broadcast %cst_40 : f32 to vector<1x16xf32>
      %93 = arith.addf %91, %92 : vector<1x16xf32>
      %94 = tpu.reciprocal %93 {approx = true} : vector<1x16xf32> -> vector<1x16xf32>
      %95 = arith.mulf %94, %86 : vector<1x16xf32>
      %96 = arith.mulf %95, %86 : vector<1x16xf32>
      %c0_41 = arith.constant 0 : index
      %c0_42 = arith.constant 0 : index
      %c0_43 = arith.constant 0 : index
      %97 = vector.load %arg4[%c0_41, %c0_42, %c0_43] : memref<1x1x16xf32, #tpu.memory_space<vmem>>, vector<1x1x16xf32>
      %98 = vector.shape_cast %97 : vector<1x1x16xf32> to vector<1x16xf32>
      %99 = arith.addf %65, %96 : vector<1x16xf32>
      %100 = arith.mulf %99, %70 : vector<1x16xf32>
      %101 = arith.addf %98, %100 : vector<1x16xf32>
      %c0_44 = arith.constant 0 : index
      %c0_45 = arith.constant 0 : index
      %c0_46 = arith.constant 0 : index
      %102 = vector.load %arg4[%c0_44, %c0_45, %c0_46] : memref<1x1x16xf32, #tpu.memory_space<vmem>>, vector<1x1x16xf32>
      %103 = vector.shape_cast %102 : vector<1x1x16xf32> to vector<1x16xf32>
      %104 = vector.shape_cast %101 : vector<1x16xf32> to vector<1x1x16xf32>
      tpu.vector_store %arg4[%c0_44, %c0_45, %c0_46], %104 {strides = array<i32>} : memref<1x1x16xf32, #tpu.memory_space<vmem>>, vector<1x1x16xf32>,
    } else {
    }
    %77 = vector.extract_strided_slice %16 {offsets = [15, 0], sizes = [1, 16], strides = [1, 1]} : vector<16x16xf32> to vector<1x16xf32>
    %c0_31 = arith.constant 0 : index
    %c0_32 = arith.constant 0 : index
    %78 = vector.load %arg5[%c0_31, %c0_32] : memref<1x16xf32, #tpu.memory_space<vmem>>, vector<1x16xf32>
    tpu.vector_store %arg5[%c0_31, %c0_32], %77 {strides = array<i32>} : memref<1x16xf32, #tpu.memory_space<vmem>>, vector<1x16xf32>,
    %79 = vector.extract_strided_slice %18 {offsets = [15, 0], sizes = [1, 16], strides = [1, 1]} : vector<16x16xf32> to vector<1x16xf32>
    %c0_33 = arith.constant 0 : index
    %c0_34 = arith.constant 0 : index
    %80 = vector.load %arg6[%c0_33, %c0_34] : memref<1x16xf32, #tpu.memory_space<vmem>>, vector<1x16xf32>
    tpu.vector_store %arg6[%c0_33, %c0_34], %79 {strides = array<i32>} : memref<1x16xf32, #tpu.memory_space<vmem>>, vector<1x16xf32>,
    return
  }
  func.func @transform_0(%arg0: i32, %arg1: i32) -> (i32, i32, i32, i32) {
    %c0_i32 = arith.constant 0 : i32
    %c0_i32_0 = arith.constant 0 : i32
    %c0_i32_1 = arith.constant 0 : i32
    return %arg0, %c0_i32, %arg1, %c0_i32_0 : i32, i32, i32, i32
  }
  func.func @transform_1(%arg0: i32, %arg1: i32) -> (i32, i32, i32, i32) {
    %c0_i32 = arith.constant 0 : i32
    %c0_i32_0 = arith.constant 0 : i32
    %c0_i32_1 = arith.constant 0 : i32
    return %arg0, %c0_i32, %arg1, %c0_i32_0 : i32, i32, i32, i32
  }
  func.func @transform_2(%arg0: i32, %arg1: i32) -> (i32, i32, i32) {
    %c0_i32 = arith.constant 0 : i32
    %c0_i32_0 = arith.constant 0 : i32
    %c0_i32_1 = arith.constant 0 : i32
    return %arg0, %c0_i32, %c0_i32_0 : i32, i32, i32
  }
}

</mosaic_0001>

<llo_original>
// kernel: tpu_custom_call.1
$region0: #{tpu_custom_call.1}
  #allocation0 [shape = 'u32[]', space=smem, size = 0x4, offset = 0x4, fixed_abs, tag = 'smem constant byte address 0x4 - core index']
  #allocation1 [shape = 'u32[144,128]{1,0:T(1,128)}', space=vmem, size = 0x12000, scoped, tag = 'internal scratch']
  #allocation2 [shape = 'f32[1,16]{1,0:T(1,128)}', space=vmem, size = 0x200, scoped, tag = 'scratch operand']
  #allocation3 [shape = 'f32[1,16]{1,0:T(1,128)}', space=vmem, size = 0x200, scoped, tag = 'scratch operand']
  %s0 = inlined_call_operand.hbm [shape: f32[2,3,16,16], index: 0, kind: input, shape index: {}]
  %s1 = inlined_call_operand.hbm [shape: f32[2,1,16,16], index: 1, kind: input, shape index: {}]
  %s2 = inlined_call_operand.hbm [shape: f32[2,1,16], index: 2, kind: output, shape index: {}]
  %s3 = sld [smem:[#allocation0]]
  $region57: #{tpu_custom_call.1} parent=0
    _
  %s5 = ssub.s32 1, %s3
  %s6 = scalar_select 0, %s5, %s3
  $region1: #{tpu_custom_call.1} parent=0
    #allocation4 [shape = 'u8[49152]{0}', space=vmem, size = 0xc000, scoped, tag = 'input window, operand 0']
    #allocation5 [shape = 's32[2]{0}', space=sflag, size = 0x8, scoped, tag = 'scoped memory for tpu_custom_call.1']
    #allocation6 [shape = 's32[2]{0}', space=sflag, size = 0x8, scoped, tag = 'scoped memory for tpu_custom_call.1']
    #allocation7 [shape = 'u8[16384]{0}', space=vmem, size = 0x4000, scoped, tag = 'input window, operand 1']
    #allocation8 [shape = 's32[2]{0}', space=sflag, size = 0x8, scoped, tag = 'scoped memory for tpu_custom_call.1']
    #allocation9 [shape = 'u8[1024]{0}', space=vmem, size = 0x400, scoped, tag = 'output window, operand 0']
    %7 = vsyncpa [#allocation5], 0
    %s8 = scalar_lea.sflag [#allocation5], 1
    %9 = vsyncpa %s8, 0
    %10 = vsyncpa [#allocation8], 0
    %s11 = scalar_lea.sflag [#allocation8], 1
    %12 = vsyncpa %s11, 0
    %13 = vsyncpa [#allocation6], 0
    %s14 = scalar_lea.sflag [#allocation6], 1
    %15 = vsyncpa %s14, 0
    loop: start=0, step=1, limit=4
    $region2: #{tpu_custom_call.1} parent=1 // loop_pre_header
      _
    $region3: #{tpu_custom_call.1} parent=1 // loop_header
      %s17 = sphi 0, %s21
      %p18 = scmp.ge.s32.totalorder %s17, 4
      %s24 = sphi 0, %s36
      %s25 = sphi 0, %s32
      %s26 = sphi 0, %s24
      %s27 = sphi 0, %s25
      %s28 = sphi 0, %s26
      %s29 = sphi 0, %s27
      %s41 = sphi 0, %s43
      %s44 = sphi 0, %s41
      %s45 = sphi 0, %s44
      %s61 = sphi 0, %s45
      %s69 = sphi 0, %s71
      %s72 = sphi 0, %s69
      %s73 = sphi 0, %s72
      %s89 = sphi 0, %s73
      %s95 = sphi 0, %s97
      %s98 = sphi 0, %s95
      %s99 = sphi 0, %s98
      %s115 = sphi 0, %s99
    $region4: #{tpu_custom_call.1} parent=1 // loop_header_branch
      %20 = sbr.rel (%p18) target = $region8
    $region5: #{tpu_custom_call.1} parent=1 // loop_body
      %s22 = ssub.s32 %s17, 1
      %s23 = ssub.s32 %s17, 2
      %s30 = sadd.s32 1, %s25
      %p31 = scmp.ge.s32.totalorder %s30, 1
      %s32 = scalar_select %p31, 0, %s30
      %s33 = sadd.s32 1, %s24
      %s34 = scalar_select %p31, %s33, %s24
      %p35 = scmp.ge.s32.totalorder %s34, 2
      %s36 = scalar_select %p35, 0, %s34
      %s37 = ssub.s32 %s24, %s36
      %s38 = ssub.s32 %s25, %s32
      %s39 = sor.u32 %s37, %s38
      %p40 = scmp.eq.s32.totalorder %s39, 0
      %s42 = sadd.s32 %s41, 1
      %s43 = scalar_select %p40, %s41, %s42
      %p46 = pneg %p40
      %p47 = scmp.eq.s32.totalorder %s17, 1
      %p48 = por %p46, %p47
      %p49 = scmp.ne.s32.totalorder %s41, %s44
      %p50 = scmp.eq.s32.totalorder %s17, 0
      %p51 = por %p49, %p50
      %p52 = scmp.ne.s32.totalorder %s41, %s44
      %p53 = scmp.eq.s32.totalorder %s22, 1
      %p54 = por %p52, %p53
      %p55 = scmp.ne.s32.totalorder %s44, %s45
      %p56 = scmp.eq.s32.totalorder %s22, 0
      %p57 = por %p55, %p56
      %p58 = scmp.ne.s32.totalorder %s44, %s45
      %p59 = scmp.eq.s32.totalorder %s23, 1
      %p60 = por %p58, %p59
      %p62 = scmp.ne.s32.totalorder %s45, %s61
      %p63 = scmp.eq.s32.totalorder %s23, 0
      %p64 = por %p62, %p63
      %s65 = ssub.s32 %s24, %s36
      %s66 = ssub.s32 %s25, %s32
      %s67 = sor.u32 %s65, %s66
      %p68 = scmp.eq.s32.totalorder %s67, 0
      %s70 = sadd.s32 %s69, 1
      %s71 = scalar_select %p68, %s69, %s70
      %p74 = pneg %p68
      %p75 = scmp.eq.s32.totalorder %s17, 1
      %p76 = por %p74, %p75
      %p77 = scmp.ne.s32.totalorder %s69, %s72
      %p78 = scmp.eq.s32.totalorder %s17, 0
      %p79 = por %p77, %p78
      %p80 = scmp.ne.s32.totalorder %s69, %s72
      %p81 = scmp.eq.s32.totalorder %s22, 1
      %p82 = por %p80, %p81
      %p83 = scmp.ne.s32.totalorder %s72, %s73
      %p84 = scmp.eq.s32.totalorder %s22, 0
      %p85 = por %p83, %p84
      %p86 = scmp.ne.s32.totalorder %s72, %s73
      %p87 = scmp.eq.s32.totalorder %s23, 1
      %p88 = por %p86, %p87
      %p90 = scmp.ne.s32.totalorder %s73, %s89
      %p91 = scmp.eq.s32.totalorder %s23, 0
      %p92 = por %p90, %p91
      %s93 = ssub.s32 %s24, %s36
      %p94 = scmp.eq.s32.totalorder %s93, 0
      %s96 = sadd.s32 %s95, 1
      %s97 = scalar_select %p94, %s95, %s96
      %p100 = pneg %p94
      %p101 = scmp.eq.s32.totalorder %s17, 1
      %p102 = por %p100, %p101
      %p103 = scmp.ne.s32.totalorder %s95, %s98
      %p104 = scmp.eq.s32.totalorder %s17, 0
      %p105 = por %p103, %p104
      %p106 = scmp.ne.s32.totalorder %s95, %s98
      %p107 = scmp.eq.s32.totalorder %s22, 1
      %p108 = por %p106, %p107
      %p109 = scmp.ne.s32.totalorder %s98, %s99
      %p110 = scmp.eq.s32.totalorder %s22, 0
      %p111 = por %p109, %p110
      %p112 = scmp.ne.s32.totalorder %s98, %s99
      %p113 = scmp.eq.s32.totalorder %s23, 1
      %p114 = por %p112, %p113
      %p116 = scmp.ne.s32.totalorder %s99, %s115
      %p117 = scmp.eq.s32.totalorder %s23, 0
      %p118 = por %p116, %p117
      %p119 = scmp.le.s32.totalorder 1, %s17
      %p120 = scmp.lt.s32.totalorder %s17, 3
      %p121 = pnand %p119, %p120
      %p122 = pneg %p121
      // Predicated region
      $region9: #{tpu_custom_call.1} parent=5 // pred_check
        _
      $region10: #{tpu_custom_call.1} parent=5 // pred_check_branch
        %124 = sbr.rel (%p121) target = $region12
      $region11: #{tpu_custom_call.1} parent=5 // pred_region
        %s125 = ssub.s32 %s17, 1
      $region12: #{tpu_custom_call.1} parent=5 // pred_fallthru
        _
      %p126 = scmp.lt.s32.totalorder %s17, 2
      // Predicated region
      $region13: #{tpu_custom_call.1} parent=5 // pred_check
        %p127 = pneg %p126
      $region14: #{tpu_custom_call.1} parent=5 // pred_check_branch
        %129 = sbr.rel (%p127) target = $region16
      $region15: #{tpu_custom_call.1} parent=5 // pred_region
        // Predicated region
        $region17: #{tpu_custom_call.1} parent=15 // pred_check
          %p130 = pneg %p51
        $region18: #{tpu_custom_call.1} parent=15 // pred_check_branch
          %132 = sbr.rel (%p130) target = $region20
        $region19: #{tpu_custom_call.1} parent=15 // pred_region
          %s133 = sand.u32 %s41, 1
          %s134 = scalar_lea.sflag [#allocation5], %s133
          %s135 = sand.u32 %s41, 1
          %s136 = smul.addr %s135, 48
          %s137 = scalar_lea.vmem [#allocation4], %s136
          %s138 = smul.u32 2, %s25
          %s140 = ssub.s32 768, 768
          %141 = vsyncadd %s134, %s140
          %s142 = smul.addr %s24, 6
          %s143 = sadd.s32 %s138, %s142
          %s144 = smul.addr %s143, 128
          %s145 = scalar_lea.hbm %s0, %s144
          %s146 = sshll.u32 %s137, 4
          %s147 = int_to_ptr.vmem [resolvable:$true] %s146
          %152 = dma.hbm_to_vmem [thread:$0]  %s145, 768, %s147, %s134, 128, 128, 8
        $region20: #{tpu_custom_call.1} parent=15 // pred_fallthru
          _
        // Predicated region
        $region21: #{tpu_custom_call.1} parent=15 // pred_check
          %p153 = pneg %p79
        $region22: #{tpu_custom_call.1} parent=15 // pred_check_branch
          %155 = sbr.rel (%p153) target = $region24
        $region23: #{tpu_custom_call.1} parent=15 // pred_region
          %s156 = sand.u32 %s69, 1
          %s157 = scalar_lea.sflag [#allocation8], %s156
          %s158 = sand.u32 %s69, 1
          %s159 = smul.addr %s158, 16
          %s160 = scalar_lea.vmem [#allocation7], %s159
          %s161 = smul.u32 2, %s25
          %s163 = ssub.s32 256, 256
          %164 = vsyncadd %s157, %s163
          %s165 = smul.addr %s24, 2
          %s166 = sadd.s32 %s161, %s165
          %s167 = smul.addr %s166, 128
          %s168 = scalar_lea.hbm %s1, %s167
          %s169 = sshll.u32 %s160, 4
          %s170 = int_to_ptr.vmem [resolvable:$true] %s169
          %175 = dma.hbm_to_vmem [thread:$0]  %s168, 256, %s170, %s157, 128, 128, 8
        $region24: #{tpu_custom_call.1} parent=15 // pred_fallthru
          _
      $region16: #{tpu_custom_call.1} parent=5 // pred_fallthru
        _
      %p176 = scmp.le.s32.totalorder 1, %s17
      %p177 = scmp.lt.s32.totalorder %s17, 3
      %p178 = pnand %p176, %p177
      %p179 = pneg %p178
      // Predicated region
      $region25: #{tpu_custom_call.1} parent=5 // pred_check
        _
      $region26: #{tpu_custom_call.1} parent=5 // pred_check_branch
        %181 = sbr.rel (%p178) target = $region28
      $region27: #{tpu_custom_call.1} parent=5 // pred_region
        %s182 = ssub.s32 %s17, 1
        %s183 = sand.u32 %s44, 1
        %s184 = scalar_lea.sflag [#allocation5], %s183
        %s185 = sand.u32 %s44, 1
        %s186 = smul.addr %s185, 48
        %s187 = scalar_lea.vmem [#allocation4], %s186
        // Predicated region
        $region29: #{tpu_custom_call.1} parent=27 // pred_check
          %p188 = pneg %p57
        $region30: #{tpu_custom_call.1} parent=27 // pred_check_branch
          %190 = sbr.rel (%p188) target = $region32
        $region31: #{tpu_custom_call.1} parent=27 // pred_region
          %191 = dma.done %s184, 768
        $region32: #{tpu_custom_call.1} parent=27 // pred_fallthru
          _
        %s192 = sand.u32 %s72, 1
        %s193 = scalar_lea.sflag [#allocation8], %s192
        %s194 = sand.u32 %s72, 1
        %s195 = smul.addr %s194, 16
        %s196 = scalar_lea.vmem [#allocation7], %s195
        // Predicated region
        $region33: #{tpu_custom_call.1} parent=27 // pred_check
          %p197 = pneg %p85
        $region34: #{tpu_custom_call.1} parent=27 // pred_check_branch
          %199 = sbr.rel (%p197) target = $region36
        $region35: #{tpu_custom_call.1} parent=27 // pred_region
          %200 = dma.done %s193, 256
        $region36: #{tpu_custom_call.1} parent=27 // pred_fallthru
          _
        %s201 = sand.u32 %s44, 1
        %s202 = scalar_lea.sflag [#allocation5], %s201
        %s203 = sand.u32 %s44, 1
        %s204 = smul.addr %s203, 48
        %s205 = scalar_lea.vmem [#allocation4], %s204
        %p206 = pneg %p57
        %p207 = pneg %p54
        %s208 = sand.u32 %s72, 1
        %s209 = scalar_lea.sflag [#allocation8], %s208
        %s210 = sand.u32 %s72, 1
        %s211 = smul.addr %s210, 16
        %s212 = scalar_lea.vmem [#allocation7], %s211
        %p213 = pneg %p85
        %p214 = pneg %p82
        %p215 = pneg %p111
        %p216 = pneg %p108
        %s217 = sand.u32 %s98, 1
        %s218 = scalar_lea.sflag [#allocation6], %s217
        %s219 = sand.u32 %s98, 1
        %s220 = scalar_lea.vmem [#allocation9], %s219
        %s221 = smul.u32 2, %s27
        %s222 = smul.u32 2, %s27
        %v223 = vld [vmem:[%s187] sm:$0xff]
        %v224 = vld [vmem:[%s187 + $0x8] sm:$0xff]
        %s225 = scalar_lea.vmem %s187, 16 [#allocation4]
        %v226 = vld [vmem:[%s225] sm:$0xff]
        %v227 = vld [vmem:[%s225 + $0x8] sm:$0xff]
        %s228 = scalar_lea.vmem %s187, 32 [#allocation4]
        %v229 = vld [vmem:[%s228] sm:$0xff]
        %v230 = vld [vmem:[%s228 + $0x8] sm:$0xff]
        %v231 = vmul.f32 %v223, 0.299
        %v232 = vmul.f32 %v224, 0.299
        %v233 = vmul.f32 %v226, 0.587
        %v234 = vmul.f32 %v227, 0.587
        %v235 = vadd.f32 %v231, %v233
        %v236 = vadd.f32 %v232, %v234
        %v237 = vmul.f32 %v229, 0.114
        %v238 = vmul.f32 %v230, 0.114
        %v239 = vadd.f32 %v235, %v237
        %v240 = vadd.f32 %v236, %v238
        %v241 = vadd.f32 %v239, 0.0001
        %v242 = vadd.f32 %v240, 0.0001
        %v243 = vlog2.pop %v241
        %v244 = vmul.f32 %v243, 0.6931472
        %v245 = vlog2.pop %v242
        %v246 = vmul.f32 %v245, 0.6931472
        %v247 = vld [vmem:[%s196] sm:$0xff]
        %v248 = vld [vmem:[%s196 + $0x8] sm:$0xff]
        %vm249 = vcmask 1047680
        %250 = vrot.lane.b32.xlu0 %v244, 16
        %v251 = vpop.permute.xlu0 %250
        %v252 = vsel %vm249, %v251, %v244
        %253 = vrot.lane.b32.xlu0 %v246, 16
        %v254 = vpop.permute.xlu0 %253
        %v255 = vsel %vm249, %v254, %v246
        %256 = vrot.lane.b32.xlu0 %v252, 16
        %v257 = vpop.permute.xlu0 %256
        %258 = vrot.lane.b32.xlu0 %v255, 16
        %v259 = vpop.permute.xlu0 %258
        %v260 = vsel %vm249, %v257, %v244
        %v261 = vsel %vm249, %v259, %v246
        %264 = vrot.lane.b32.xlu0 %v260, 127
        %v265 = vpop.permute.xlu0 %264
        %266 = vrot.lane.b32.xlu0 %v261, 127
        %v267 = vpop.permute.xlu0 %266
        %v270 = vsub.f32 %v244, %v265
        %v271 = vsub.f32 %v246, %v267
        %272 = vrot.lane.b32.xlu0 %v247, 16
        %v273 = vpop.permute.xlu0 %272
        %v274 = vsel %vm249, %v273, %v247
        %275 = vrot.lane.b32.xlu0 %v248, 16
        %v276 = vpop.permute.xlu0 %275
        %v277 = vsel %vm249, %v276, %v248
        %278 = vrot.lane.b32.xlu0 %v274, 16
        %v279 = vpop.permute.xlu0 %278
        %280 = vrot.lane.b32.xlu0 %v277, 16
        %v281 = vpop.permute.xlu0 %280
        %v282 = vsel %vm249, %v279, %v247
        %v283 = vsel %vm249, %v281, %v248
        %286 = vrot.lane.b32.xlu0 %v282, 127
        %v287 = vpop.permute.xlu0 %286
        %288 = vrot.lane.b32.xlu0 %v283, 127
        %v289 = vpop.permute.xlu0 %288
        %v292 = vsub.f32 %v247, %v287
        %v293 = vsub.f32 %v248, %v289
        %v294 = vrot.slane %v244, 1
        %v295 = vrot.slane %v246, 1
        %v296 = vlaneseq
        %v297 = vshrl.u32 %v296, 7
        %vm298 = vcmp.lt.s32.totalorder %v297, 7
        %v299 = vsel %vm298, %v294, %v295
        %v300 = vsel %vm298, %v295, %v294
        %v301 = vsub.f32 %v244, %v299
        %v302 = vsub.f32 %v246, %v300
        %v303 = vrot.slane %v247, 1
        %v304 = vrot.slane %v248, 1
        %v305 = vsel %vm298, %v303, %v304
        %v306 = vsel %vm298, %v304, %v303
        %v307 = vsub.f32 %v247, %v305
        %v308 = vsub.f32 %v248, %v306
        %v309 = vand.u32 2147483647, %v270
        %v310 = vand.u32 2147483647, %v271
        %v311 = vlog2.pop %v309
        %v312 = vmul.f32 %v311, 0.6931472
        %v313 = vlog2.pop %v310
        %v314 = vmul.f32 %v313, 0.6931472
        %v315 = vmul.f32 %v312, 1.2
        %v316 = vmul.f32 %v314, 1.2
        %v317 = vmul.f32 %v315, 1.442695
        %v318 = vpow.pop %v317
        %v319 = vmul.f32 %v316, 1.442695
        %v320 = vpow.pop %v319
        %v321 = vadd.f32 %v318, 0.0001
        %v322 = vadd.f32 %v320, 0.0001
        %v323 = vrcp.pop %v321
        %v324 = vrcp.pop %v322
        %v325 = vmul.f32 %v323, %v292
        %v326 = vmul.f32 %v324, %v293
        %v327 = vmul.f32 %v325, %v292
        %v328 = vmul.f32 %v326, %v293
        %v329 = vand.u32 2147483647, %v301
        %v330 = vand.u32 2147483647, %v302
        %v331 = vlog2.pop %v329
        %v332 = vmul.f32 %v331, 0.6931472
        %v333 = vlog2.pop %v330
        %v334 = vmul.f32 %v333, 0.6931472
        %v335 = vmul.f32 %v332, 1.2
        %v336 = vmul.f32 %v334, 1.2
        %v337 = vmul.f32 %v335, 1.442695
        %v338 = vpow.pop %v337
        %v339 = vmul.f32 %v336, 1.442695
        %v340 = vpow.pop %v339
        %v341 = vadd.f32 %v338, 0.0001
        %v342 = vadd.f32 %v340, 0.0001
        %v343 = vrcp.pop %v341
        %v344 = vrcp.pop %v342
        %v345 = vmul.f32 %v343, %v307
        %v346 = vmul.f32 %v344, %v308
        %v347 = vmul.f32 %v345, %v307
        %v348 = vmul.f32 %v346, %v308
        %v349 = vadd.s32 %v297, 8
        %vm350 = vcmp.lt.s32.totalorder %v297, 15
        %vm351 = vcmp.lt.s32.totalorder %v349, 15
        %v352 = vsel %vm350, 1, 0
        %v353 = vsel %vm351, 1, 0
        %v354 = vcvt.s32.f32 %v352
        %v355 = vcvt.s32.f32 %v353
        %p356 = scmp.eq.s32.totalorder %s27, 0
        %s357 = scalar_select %p356, 1, 0
        %s358 = ssub.s32 16, %s357
        %v359 = vstv %s358
        %vm360 = vcmp.lt.s32.totalorder %v297, %v359
        %vm361 = vcmp.lt.s32.totalorder %v349, %v359
        %v362 = vsel %vm360, 1, 0
        %v363 = vsel %vm361, 1, 0
        %v364 = vcvt.s32.f32 %v362
        %v365 = vcvt.s32.f32 %v363
        %v366 = vmul.f32 %v327, %v364
        %v367 = vmul.f32 %v328, %v365
        %v368 = vmul.f32 %v347, %v354
        %v369 = vmul.f32 %v348, %v355
        %v370 = vadd.f32 %v366, %v368
        %v371 = vadd.f32 %v367, %v369
        %vm372 = vcmask 130048
        %v373 = vsel %vm372, %v370, 0.0
        %v374 = vsel %vm372, %v371, 0.0
        %v375 = vadd.f32 %v373, %v374
        %v376 = vrot.slane %v375, 4
        %v377 = vadd.f32 %v375, %v376
        %v378 = vrot.slane %v377, 2
        %v379 = vadd.f32 %v377, %v378
        %v380 = vrot.slane %v379, 1
        %v381 = vadd.f32 %v379, %v380
        %v382 = vlaneseq
        %v383 = vand.u32 %v382, 127
        %vm384 = vcmp.lt.s32.totalorder %v383, 15
        %v385 = vsel %vm384, 1, 0
        %v386 = vcvt.s32.f32 %v385
        // Predicated region
        $region37: #{tpu_custom_call.1} parent=27 // pred_check
          %p387 = pneg %p356
        $region38: #{tpu_custom_call.1} parent=27 // pred_check_branch
          %389 = sbr.rel (%p387) target = $region40
        $region39: #{tpu_custom_call.1} parent=27 // pred_region
          %v390 = vmul.f32 %v381, %v386
          %vm391 = vcmask 122880
          %392 = vst.msk [vmem:[%s220] sm:$0x1] %vm391, %v390
        $region40: #{tpu_custom_call.1} parent=27 // pred_fallthru
          _
        %p393 = scmp.gt.s32.totalorder %s27, 0
        // Predicated region
        $region41: #{tpu_custom_call.1} parent=27 // pred_check
          %p394 = pneg %p393
        $region42: #{tpu_custom_call.1} parent=27 // pred_check_branch
          %396 = sbr.rel (%p394) target = $region44
        $region43: #{tpu_custom_call.1} parent=27 // pred_region
          %v397 = vld [vmem:[#allocation2] sm:$0x1]
          %v398 = vsub.f32 %v397, %v244
          %v399 = vld [vmem:[#allocation3] sm:$0x1]
          %v400 = vsub.f32 %v399, %v247
          %v401 = vand.u32 2147483647, %v398
          %v402 = vlog2.pop %v401
          %v403 = vmul.f32 %v402, 0.6931472
          %v404 = vmul.f32 %v403, 1.2
          %v405 = vmul.f32 %v404, 1.442695
          %v406 = vpow.pop %v405
          %v407 = vadd.f32 %v406, 0.0001
          %v408 = vrcp.pop %v407
          %v409 = vmul.f32 %v408, %v400
          %v410 = vmul.f32 %v409, %v400
          %v411 = vld [vmem:[%s220] sm:$0x1]
          %v412 = vadd.f32 %v381, %v410
          %v413 = vmul.f32 %v412, %v386
          %v414 = vadd.f32 %v411, %v413
          %vm415 = vcmask 122880
          %416 = vst.msk [vmem:[%s220] sm:$0x1] %vm415, %v414
        $region44: #{tpu_custom_call.1} parent=27 // pred_fallthru
          _
        %vm417 = vcmask 130055
        %418 = vst.msk [vmem:[#allocation2 - $0x7] sm:$0x80] %vm417, %v246
        %419 = vst.msk [vmem:[#allocation3 - $0x7] sm:$0x80] %vm417, %v248
        %s420 = sand.u32 %s98, 1
        %s421 = scalar_lea.sflag [#allocation6], %s420
        %s422 = sand.u32 %s98, 1
        %s423 = scalar_lea.vmem [#allocation9], %s422
        // Predicated region
        $region45: #{tpu_custom_call.1} parent=27 // pred_check
          %p424 = pneg %p108
        $region46: #{tpu_custom_call.1} parent=27 // pred_check_branch
          %426 = sbr.rel (%p424) target = $region48
        $region47: #{tpu_custom_call.1} parent=27 // pred_region
          %s428 = ssub.s32 16, 16
          %429 = vsyncadd %s421, %s428
          %s430 = smul.addr %s26, 16
          %s431 = scalar_lea.hbm %s2, %s430
          %s433 = sshll.u32 %s423, 4
          %s434 = int_to_ptr.vmem [resolvable:$true] %s433
          %436 = dma.vmem_to_hbm [thread:$0]  %s434, 16, %s431, %s421
        $region48: #{tpu_custom_call.1} parent=27 // pred_fallthru
          _
      $region28: #{tpu_custom_call.1} parent=5 // pred_fallthru
        _
      %p437 = scmp.le.s32.totalorder 2, %s17
      // Predicated region
      $region49: #{tpu_custom_call.1} parent=5 // pred_check
        %p438 = pneg %p437
      $region50: #{tpu_custom_call.1} parent=5 // pred_check_branch
        %440 = sbr.rel (%p438) target = $region52
      $region51: #{tpu_custom_call.1} parent=5 // pred_region
        %s441 = ssub.s32 %s17, 2
        // Predicated region
        $region53: #{tpu_custom_call.1} parent=51 // pred_check
          %p442 = pneg %p114
        $region54: #{tpu_custom_call.1} parent=51 // pred_check_branch
          %444 = sbr.rel (%p442) target = $region56
        $region55: #{tpu_custom_call.1} parent=51 // pred_region
          %s445 = sand.u32 %s99, 1
          %s446 = scalar_lea.sflag [#allocation6], %s445
          %s447 = sand.u32 %s99, 1
          %s448 = scalar_lea.vmem [#allocation9], %s447
          %449 = dma.done %s446, 16
        $region56: #{tpu_custom_call.1} parent=51 // pred_fallthru
          _
      $region52: #{tpu_custom_call.1} parent=5 // pred_fallthru
        _
    $region6: #{tpu_custom_call.1} parent=1 // loop_footer
      %s21 = sadd.s32 1, %s17
    $region7: #{tpu_custom_call.1} parent=1 // loop_footer_branch
      %16 = sbr.rel target = $region3
    $region8: #{tpu_custom_call.1} parent=1 // loop_exit
      _
    %450 = vsyncpa [#allocation5], 1
    %s451 = scalar_lea.sflag [#allocation5], 1
    %452 = vsyncpa %s451, 1
    %453 = vsyncpa [#allocation8], 1
    %s454 = scalar_lea.sflag [#allocation8], 1
    %455 = vsyncpa %s454, 1
    %456 = vsyncpa [#allocation6], 1
    %s457 = scalar_lea.sflag [#allocation6], 1
    %458 = vsyncpa %s457, 1

</llo_original>
